<compile_context>
chip_gen: v7x
topology: tpu7x:2x2x1
jax: 0.10.0
libtpu: 0.0.40
codegen_flags: <defaults>
</compile_context>

<pallas_src>
from functools import partial

import jax
import jax.numpy as jnp
from jax import lax
from jax.experimental import pallas as pl
from jax.experimental.pallas import tpu as pltpu


def _round_up(n, m):
    return ((n + m - 1) // m) * m


def _cdiv(n, m):
    return (n + m - 1) // m


def _bspline_kernel(u_ref, grid_ref, out_ref, *, weight_dtype=jnp.float32):
    u = u_ref[...]                       # (1, TB)      batch on lanes
    g = grid_ref[...]                    # (C, W_PAD)   channels on sublanes
    w_pad = g.shape[1]
    w = w_pad - 2                        # original resolution (static)
    tb = u.shape[1]

    # continuous coordinate in original-grid index space: [0, 1] -> [0, w-1]
    x = u * jnp.float32(w - 1)
    i = jnp.clip(jnp.floor(x), 0.0, jnp.float32(w - 2))    # interval index
    t = x - i                                               # local coord

    # uniform cubic B-spline basis weights, all (1, TB) lane-dense rows
    t2 = t * t
    t3 = t2 * t
    w0 = (1.0 - 3.0 * t + 3.0 * t2 - t3) * (1.0 / 6.0)
    w1 = (4.0 - 6.0 * t2 + 3.0 * t3) * (1.0 / 6.0)
    w2 = (1.0 + 3.0 * t + 3.0 * t2 - 3.0 * t3) * (1.0 / 6.0)
    w3 = t3 * (1.0 / 6.0)

    # Dense (W_PAD, TB) weight matrix: padded taps for interval i are
    # i, i+1, i+2, i+3.  Built as a sum of 4 independent masked products so
    # the compare/convert/mul streams co-issue across the 4 VALU slots
    # (no serial nested-select chain on the largest elementwise tensor).
    i_int = i.astype(jnp.int32)                                   # (1, TB)
    k = lax.broadcasted_iota(jnp.int32, (w_pad, tb), 0)           # (W_PAD, TB)
    d = k - i_int                                                 # (W_PAD, TB)

    wd = weight_dtype
    w0 = w0.astype(wd)
    w1 = w1.astype(wd)
    w2 = w2.astype(wd)
    w3 = w3.astype(wd)
    W = ((d == 0).astype(wd) * w0
         + (d == 1).astype(wd) * w1
         + (d == 2).astype(wd) * w2
         + (d == 3).astype(wd) * w3)                              # (W_PAD, TB)

    # (C, W_PAD) @ (W_PAD, TB) -> (C, TB): single MXU pass, lane-dense N=batch.
    out_ref[...] = jnp.dot(g.astype(wd), W, preferred_element_type=jnp.float32)


def _pad_grid_1d(data):
    """data: (c, w) -> (c, w+2) with linear-extrapolated edge control points."""
    left = 2.0 * data[:, 0:1] - data[:, 1:2]
    right = 2.0 * data[:, -1:] - data[:, -2:-1]
    return jnp.concatenate([left, data, right], axis=1)


class CubicBSplineGrid1dPallas:
    """JAX/Pallas equivalent of CubicBSplineGrid with ndim=1."""

    ndim = 1

    def __init__(self, resolution=None, n_channels=1, data=None):
        if resolution is None:
            resolution = (2,) * self.ndim
        if isinstance(resolution, int):
            resolution = (resolution,)
        if data is None:
            # module default is zeros; kept deterministic here.
            data = jnp.zeros((n_channels, *resolution), jnp.float32)
        self.data = jnp.asarray(data, jnp.float32)   # (c, w)
        assert self.data.ndim == 2 and self.data.shape[1] >= 2, (
            "1D cubic B-spline grid requires resolution >= 2")
        # cache channel-major edge-extended control grid once: (C, W+2)
        self._grid_padded = _pad_grid_1d(self.data)

    @property
    def n_channels(self):
        return self.data.shape[0]

    @property
    def resolution(self):
        return tuple(self.data.shape[1:])

    def _coerce_coordinates(self, u):
        return jnp.atleast_1d(jnp.asarray(u, jnp.float32))

    def __call__(self, u, *, tile_b=4096, channel_major=False,
                 bf16_weights=False):
        """Evaluate the spline at coordinates u in [0, 1].

        Returns (b, n_channels) by default (torch parity).  channel_major=True
        returns the kernel-native (n_channels, b) and skips the wrapper
        transpose (saves one full HBM read+write of the output).
        bf16_weights=True builds the weight matrix in bf16 (v6e/v7x only;
        ~1e-3 accuracy).
        """
        u = self._coerce_coordinates(u)          # (b,)
        b = u.shape[0]
        c, w = self.data.shape

        gp = self._grid_padded                   # (c, w+2)
        w_pad = gp.shape[1]

        # Batch tile selection:
        #   * 256-aligned (v6e/v7x MXU width; multiple of 128 for v5e).
        #   * large default so per-grid-step overhead (~0.35 us) is amortized.
        #   * for b > 256, cap so the grid has >= 2 steps: the "parallel"
        #     batch axis then shards across v7x's two TensorCores.
        #   * no batch padding: Pallas masks the ragged last block.
        tile_b = max(256, (tile_b // 256) * 256)
        if b > 256:
            tile_b = min(tile_b, max(256, _round_up(_cdiv(b, 2), 256)))
        tile_b = min(tile_b, _round_up(b, 256))
        grid = (_cdiv(b, tile_b),)

        u2 = u.reshape(1, b)                     # batch on lanes, no pad copy

        kernel = partial(
            _bspline_kernel,
            weight_dtype=jnp.bfloat16 if bf16_weights else jnp.float32)

        out_ct = pl.pallas_call(
            kernel,
            out_shape=jax.ShapeDtypeStruct((c, b), jnp.float32),
            grid=grid,
            in_specs=[
                pl.BlockSpec((1, tile_b), lambda i: (0, i)),
                pl.BlockSpec((c, w_pad), lambda i: (0, 0)),
            ],
            out_specs=pl.BlockSpec((c, tile_b), lambda i: (0, i)),
            compiler_params=pltpu.CompilerParams(
                dimension_semantics=("parallel",)),
        )(u2, gp)                                  # (c, b), channel-major

        if channel_major:
            return out_ct                          # (c, b)
        return out_ct.T                            # (b, c) — torch parity


def _reference(data, u):
    """Pure-JAX reference of the same cubic B-spline interpolation."""
    c, w = data.shape
    g = _pad_grid_1d(data)                        # (c, w+2)
    x = u * (w - 1)
    i = jnp.clip(jnp.floor(x), 0, w - 2).astype(jnp.int32)
    t = x - i.astype(jnp.float32)
    t2, t3 = t * t, t * t * t
    w0 = (1 - 3 * t + 3 * t2 - t3) / 6
    w1 = (4 - 6 * t2 + 3 * t3) / 6
    w2 = (1 + 3 * t + 3 * t2 - 3 * t3) / 6
    w3 = t3 / 6
    p = jnp.stack([g[:, i + k] for k in range(4)], axis=0)   # (4, c, b)
    wts = jnp.stack([w0, w1, w2, w3], axis=0)                # (4, b)
    return jnp.einsum('kcb,kb->bc', p, wts)


if __name__ == "__main__":
    key = jax.random.PRNGKey(0)
    k_data, k_u = jax.random.split(key)

    n_channels, resolution, batch = 4, 16, 128
    grid_data = jax.random.normal(k_data, (n_channels, resolution), jnp.float32)
    u = jax.random.uniform(k_u, (batch,), jnp.float32)        # coords in [0, 1]

    module = CubicBSplineGrid1dPallas(resolution=resolution,
                                      n_channels=n_channels,
                                      data=grid_data)

    # default (b, c) output, f32 weights
    out = jax.block_until_ready(module(u))
    ref = _reference(grid_data, u)
    assert out.shape == (batch, n_channels)
    assert jnp.allclose(out, ref, atol=1e-5, rtol=1e-5), "mismatch vs reference"

    # ragged batch (not a multiple of the tile): exercises the masked last
    # block path that replaced the wrapper-side jnp.pad.
    b2 = 300
    u_ragged = jax.random.uniform(jax.random.PRNGKey(1), (b2,), jnp.float32)
    out2 = jax.block_until_ready(module(u_ragged))
    ref2 = _reference(grid_data, u_ragged)
    assert out2.shape == (b2, n_channels)
    assert jnp.allclose(out2, ref2, atol=1e-5, rtol=1e-5), "ragged mismatch"

    # channel-major path (skips the wrapper transpose)
    out_cm = jax.block_until_ready(module(u, channel_major=True))
    assert out_cm.shape == (n_channels, batch)
    assert jnp.allclose(out_cm.T, ref, atol=1e-5, rtol=1e-5), "cm mismatch"

    # opt-in bf16 weight build (loose tolerance by design)
    out_bf16 = jax.block_until_ready(module(u, bf16_weights=True))
    assert out_bf16.shape == (batch, n_channels)
    assert bool(jnp.all(jnp.isfinite(out_bf16)))
    assert jnp.allclose(out_bf16, ref, atol=1e-1, rtol=5e-2), "bf16 mismatch"

    print("KERNEL_OK")
</pallas_src>

<mosaic_0001>
module attributes {stable_mosaic.version = 11 : i64} {
  func.func @_bspline_kernel(%arg0: i32, %arg1: memref<1x256xf32, #tpu.memory_space<vmem>>, %arg2: memref<4x18xf32, #tpu.memory_space<vmem>>, %arg3: memref<4x256xf32, #tpu.memory_space<vmem>>) attributes {dimension_semantics = [#tpu.dimension_semantics<parallel>], iteration_bounds = array<i64: 1>, scalar_prefetch = 0 : i64, scratch_operands = 0 : i64, tpu.core_type = #tpu.core_type<tc>, window_params = [{transform_indices = @transform_0, window_bounds = array<i64: 1, 256>}, {pipeline_mode = #tpu.pipeline_mode<synchronous>, transform_indices = @transform_1, window_bounds = array<i64: 4, 18>}, {transform_indices = @transform_2, window_bounds = array<i64: 4, 256>}]} {
    %c0 = arith.constant 0 : index
    %c0_0 = arith.constant 0 : index
    %0 = vector.load %arg1[%c0, %c0_0] : memref<1x256xf32, #tpu.memory_space<vmem>>, vector<1x256xf32>
    %c0_1 = arith.constant 0 : index
    %c0_2 = arith.constant 0 : index
    %1 = vector.load %arg2[%c0_1, %c0_2] : memref<4x18xf32, #tpu.memory_space<vmem>>, vector<4x18xf32>
    %cst = arith.constant 1.500000e+01 : f32
    %2 = vector.broadcast %cst : f32 to vector<1x256xf32>
    %3 = arith.mulf %0, %2 : vector<1x256xf32>
    %4 = math.floor %3 : vector<1x256xf32>
    %cst_3 = arith.constant 0.000000e+00 : f32
    %cst_4 = arith.constant 1.400000e+01 : f32
    %5 = vector.broadcast %cst_3 : f32 to vector<1x256xf32>
    %6 = arith.maximumf %5, %4 : vector<1x256xf32>
    %7 = vector.broadcast %cst_4 : f32 to vector<1x256xf32>
    %8 = arith.minimumf %7, %6 : vector<1x256xf32>
    %9 = arith.subf %3, %8 : vector<1x256xf32>
    %10 = arith.mulf %9, %9 : vector<1x256xf32>
    %11 = arith.mulf %10, %9 : vector<1x256xf32>
    %cst_5 = arith.constant 3.000000e+00 : f32
    %12 = vector.broadcast %cst_5 : f32 to vector<1x256xf32>
    %13 = arith.mulf %12, %9 : vector<1x256xf32>
    %cst_6 = arith.constant 1.000000e+00 : f32
    %14 = vector.broadcast %cst_6 : f32 to vector<1x256xf32>
    %15 = arith.subf %14, %13 : vector<1x256xf32>
    %cst_7 = arith.constant 3.000000e+00 : f32
    %16 = vector.broadcast %cst_7 : f32 to vector<1x256xf32>
    %17 = arith.mulf %16, %10 : vector<1x256xf32>
    %18 = arith.addf %15, %17 : vector<1x256xf32>
    %19 = arith.subf %18, %11 : vector<1x256xf32>
    %cst_8 = arith.constant 0.166666672 : f32
    %20 = vector.broadcast %cst_8 : f32 to vector<1x256xf32>
    %21 = arith.mulf %19, %20 : vector<1x256xf32>
    %cst_9 = arith.constant 6.000000e+00 : f32
    %22 = vector.broadcast %cst_9 : f32 to vector<1x256xf32>
    %23 = arith.mulf %22, %10 : vector<1x256xf32>
    %cst_10 = arith.constant 4.000000e+00 : f32
    %24 = vector.broadcast %cst_10 : f32 to vector<1x256xf32>
    %25 = arith.subf %24, %23 : vector<1x256xf32>
    %cst_11 = arith.constant 3.000000e+00 : f32
    %26 = vector.broadcast %cst_11 : f32 to vector<1x256xf32>
    %27 = arith.mulf %26, %11 : vector<1x256xf32>
    %28 = arith.addf %25, %27 : vector<1x256xf32>
    %cst_12 = arith.constant 0.166666672 : f32
    %29 = vector.broadcast %cst_12 : f32 to vector<1x256xf32>
    %30 = arith.mulf %28, %29 : vector<1x256xf32>
    %cst_13 = arith.constant 3.000000e+00 : f32
    %31 = vector.broadcast %cst_13 : f32 to vector<1x256xf32>
    %32 = arith.mulf %31, %9 : vector<1x256xf32>
    %cst_14 = arith.constant 1.000000e+00 : f32
    %33 = vector.broadcast %cst_14 : f32 to vector<1x256xf32>
    %34 = arith.addf %33, %32 : vector<1x256xf32>
    %cst_15 = arith.constant 3.000000e+00 : f32
    %35 = vector.broadcast %cst_15 : f32 to vector<1x256xf32>
    %36 = arith.mulf %35, %10 : vector<1x256xf32>
    %37 = arith.addf %34, %36 : vector<1x256xf32>
    %cst_16 = arith.constant 3.000000e+00 : f32
    %38 = vector.broadcast %cst_16 : f32 to vector<1x256xf32>
    %39 = arith.mulf %38, %11 : vector<1x256xf32>
    %40 = arith.subf %37, %39 : vector<1x256xf32>
    %cst_17 = arith.constant 0.166666672 : f32
    %41 = vector.broadcast %cst_17 : f32 to vector<1x256xf32>
    %42 = arith.mulf %40, %41 : vector<1x256xf32>
    %cst_18 = arith.constant 0.166666672 : f32
    %43 = vector.broadcast %cst_18 : f32 to vector<1x256xf32>
    %44 = arith.mulf %11, %43 : vector<1x256xf32>
    %45 = arith.fptosi %8 : vector<1x256xf32> to vector<1x256xi32>
    %46 = tpu.iota {dimensions = array<i32: 0>} : vector<18x256xi32>
    %47 = vector.broadcast %45 : vector<1x256xi32> to vector<18x256xi32>
    %48 = arith.subi %46, %47 : vector<18x256xi32>
    %c0_i32 = arith.constant 0 : i32
    %49 = vector.broadcast %c0_i32 : i32 to vector<18x256xi32>
    %50 = arith.cmpi eq, %48, %49 : vector<18x256xi32>
    %51 = arith.extui %50 : vector<18x256xi1> to vector<18x256xi32>
    %52 = arith.sitofp %51 : vector<18x256xi32> to vector<18x256xf32>
    %53 = vector.broadcast %21 : vector<1x256xf32> to vector<18x256xf32>
    %54 = arith.mulf %52, %53 : vector<18x256xf32>
    %c1_i32 = arith.constant 1 : i32
    %55 = vector.broadcast %c1_i32 : i32 to vector<18x256xi32>
    %56 = arith.cmpi eq, %48, %55 : vector<18x256xi32>
    %57 = arith.extui %56 : vector<18x256xi1> to vector<18x256xi32>
    %58 = arith.sitofp %57 : vector<18x256xi32> to vector<18x256xf32>
    %59 = vector.broadcast %30 : vector<1x256xf32> to vector<18x256xf32>
    %60 = arith.mulf %58, %59 : vector<18x256xf32>
    %61 = arith.addf %54, %60 : vector<18x256xf32>
    %c2_i32 = arith.constant 2 : i32
    %62 = vector.broadcast %c2_i32 : i32 to vector<18x256xi32>
    %63 = arith.cmpi eq, %48, %62 : vector<18x256xi32>
    %64 = arith.extui %63 : vector<18x256xi1> to vector<18x256xi32>
    %65 = arith.sitofp %64 : vector<18x256xi32> to vector<18x256xf32>
    %66 = vector.broadcast %42 : vector<1x256xf32> to vector<18x256xf32>
    %67 = arith.mulf %65, %66 : vector<18x256xf32>
    %68 = arith.addf %61, %67 : vector<18x256xf32>
    %c3_i32 = arith.constant 3 : i32
    %69 = vector.broadcast %c3_i32 : i32 to vector<18x256xi32>
    %70 = arith.cmpi eq, %48, %69 : vector<18x256xi32>
    %71 = arith.extui %70 : vector<18x256xi1> to vector<18x256xi32>
    %72 = arith.sitofp %71 : vector<18x256xi32> to vector<18x256xf32>
    %73 = vector.broadcast %44 : vector<1x256xf32> to vector<18x256xf32>
    %74 = arith.mulf %72, %73 : vector<18x256xf32>
    %75 = arith.addf %68, %74 : vector<18x256xf32>
    %cst_19 = arith.constant dense<0.000000e+00> : vector<4x256xf32>
    %76 = tpu.matmul %1, %75, %cst_19 {dimension_numbers = #tpu.dot_dimension_numbers<[1], [0], [0], [1], [0, 0, 1, 1], [], []>} : vector<4x18xf32>, vector<18x256xf32>, vector<4x256xf32> -> vector<4x256xf32>
    %c0_20 = arith.constant 0 : index
    %c0_21 = arith.constant 0 : index
    %77 = vector.load %arg3[%c0_20, %c0_21] : memref<4x256xf32, #tpu.memory_space<vmem>>, vector<4x256xf32>
    tpu.vector_store %arg3[%c0_20, %c0_21], %76 {strides = array<i32>} : memref<4x256xf32, #tpu.memory_space<vmem>>, vector<4x256xf32>,
    return
  }
  func.func @transform_0(%arg0: i32) -> (i32, i32) {
    %c0_i32 = arith.constant 0 : i32
    %c0_i32_0 = arith.constant 0 : i32
    return %c0_i32, %arg0 : i32, i32
  }
  func.func @transform_1(%arg0: i32) -> (i32, i32) {
    %c0_i32 = arith.constant 0 : i32
    %c0_i32_0 = arith.constant 0 : i32
    %c0_i32_1 = arith.constant 0 : i32
    return %c0_i32, %c0_i32_0 : i32, i32
  }
  func.func @transform_2(%arg0: i32) -> (i32, i32) {
    %c0_i32 = arith.constant 0 : i32
    %c0_i32_0 = arith.constant 0 : i32
    return %c0_i32, %arg0 : i32, i32
  }
}

</mosaic_0001>

<llo_original>
// kernel: tpu_custom_call.1
$region0: #{tpu_custom_call.1}
  #allocation0 [shape = 'u32[]', space=smem, size = 0x4, offset = 0x4, fixed_abs, tag = 'smem constant byte address 0x4 - core index']
  #allocation1 [shape = 'u32[144,128]{1,0:T(1,128)}', space=vmem, size = 0x12000, scoped, tag = 'internal scratch']
  %s0 = inlined_call_operand.hbm [shape: f32[1,128], index: 0, kind: input, shape index: {}]
  %s1 = inlined_call_operand.hbm [shape: f32[4,18], index: 1, kind: input, shape index: {}]
  %s2 = inlined_call_operand.hbm [shape: f32[4,128], index: 2, kind: output, shape index: {}]
  %s3 = sld [smem:[#allocation0]]
  $region26: #{tpu_custom_call.1} parent=0
    _
  %s5 = ssub.s32 1, %s3
  %s6 = scalar_select 0, %s5, %s3
  $region1: #{tpu_custom_call.1} parent=0
    #allocation2 [shape = 'u8[1024]{0}', space=vmem, size = 0x400, scoped, tag = 'input window, operand 0, single buffered']
    #allocation3 [shape = 's32[1]{0}', space=sflag, size = 0x4, scoped, tag = 'scoped memory for tpu_custom_call.1']
    #allocation4 [shape = 's32[1]{0}', space=sflag, size = 0x4, scoped, tag = 'scoped memory for tpu_custom_call.1']
    #allocation5 [shape = 'u8[2048]{0}', space=vmem, size = 0x800, scoped, tag = 'input window, operand 1, single buffered']
    #allocation6 [shape = 's32[1]{0}', space=sflag, size = 0x4, scoped, tag = 'scoped memory for tpu_custom_call.1']
    #allocation7 [shape = 'u8[4096]{0}', space=vmem, size = 0x1000, scoped, tag = 'output window, operand 0, single buffered']
    %7 = vsyncpa [#allocation3], 0
    %8 = vsyncpa [#allocation6], 0
    %9 = vsyncpa [#allocation4], 0
    // Predicated region
    $region2: #{tpu_custom_call.1} parent=1 // pred_check
      _
    $region3: #{tpu_custom_call.1} parent=1 // pred_check_branch
      %11 = sbr.rel (0) target = $region5
    $region4: #{tpu_custom_call.1} parent=1 // pred_region
      %s13 = ssub.s32 32, 16
      %14 = vsyncadd [#allocation3], %s13
      %s16 = sshll.u32 [#allocation2], 4
      %s17 = int_to_ptr.vmem [resolvable:$true] %s16
      %19 = dma.hbm_to_vmem [thread:$0]  %s0, 16, %s17, [#allocation3]
    $region5: #{tpu_custom_call.1} parent=1 // pred_fallthru
      _
    // Predicated region
    $region6: #{tpu_custom_call.1} parent=1 // pred_check
      _
    $region7: #{tpu_custom_call.1} parent=1 // pred_check_branch
      %21 = sbr.rel (0) target = $region9
    $region8: #{tpu_custom_call.1} parent=1 // pred_region
      %s23 = ssub.s32 64, 64
      %24 = vsyncadd [#allocation6], %s23
      %s26 = sshll.u32 [#allocation5], 4
      %s27 = int_to_ptr.vmem [resolvable:$true] %s26
      %29 = dma.hbm_to_vmem [thread:$0]  %s1, 64, %s27, [#allocation6]
    $region9: #{tpu_custom_call.1} parent=1 // pred_fallthru
      _
    // Predicated region
    $region10: #{tpu_custom_call.1} parent=1 // pred_check
      _
    $region11: #{tpu_custom_call.1} parent=1 // pred_check_branch
      %31 = sbr.rel (0) target = $region13
    $region12: #{tpu_custom_call.1} parent=1 // pred_region
      %32 = dma.done [#allocation3], 32
    $region13: #{tpu_custom_call.1} parent=1 // pred_fallthru
      _
    // Predicated region
    $region14: #{tpu_custom_call.1} parent=1 // pred_check
      _
    $region15: #{tpu_custom_call.1} parent=1 // pred_check_branch
      %34 = sbr.rel (0) target = $region17
    $region16: #{tpu_custom_call.1} parent=1 // pred_region
      %35 = dma.done [#allocation6], 64
    $region17: #{tpu_custom_call.1} parent=1 // pred_fallthru
      _
    %v36 = vld [vmem:[#allocation2] sm:$0x3]
    %v37 = vld [vmem:[#allocation5] sm:$0xf]
    %v38 = vmul.f32 %v36, 15.0
    %v39 = vfloor.f32 %v38
    %v40 = vmax.f32 %v39, 0.0
    %v41 = vmin.f32 %v40, 14.0
    %v42 = vsub.f32 %v38, %v41
    %v43 = vmul.f32 %v42, %v42
    %v44 = vmul.f32 %v43, %v42
    %v45 = vmul.f32 %v42, 3.0
    %v46 = vsub.f32 1.0, %v45
    %v47 = vmul.f32 %v43, 3.0
    %v48 = vadd.f32 %v46, %v47
    %v49 = vsub.f32 %v48, %v44
    %v50 = vmul.f32 %v49, 0.16666667
    %v51 = vmul.f32 %v43, 6.0
    %v52 = vsub.f32 4.0, %v51
    %v53 = vmul.f32 %v44, 3.0
    %v54 = vadd.f32 %v52, %v53
    %v55 = vmul.f32 %v54, 0.16666667
    %v56 = vadd.f32 %v45, 1.0
    %v57 = vadd.f32 %v56, %v47
    %v58 = vsub.f32 %v57, %v53
    %v59 = vmul.f32 %v58, 0.16666667
    %v60 = vmul.f32 %v44, 0.16666667
    %v61 = vcvt.f32.s32.to.zero.pseudo %v41
    %v62 = vlaneseq
    %v63 = vshrl.u32 %v62, 7
    %v64 = vadd.s32 %v63, 8
    %v65 = vadd.s32 %v63, 16
    %v66 = vlaneseq
    %v67 = vshrl.u32 %v66, 7
    %v68 = vsub.s32 0, %v67
    %v69 = vrot.slane %v61, %v68
    %v70 = vlaneseq
    %v71 = vshrl.u32 %v70, 7
    %v72 = vsub.s32 1, %v71
    %v73 = vrot.slane %v61, %v72
    %v74 = vsub.s32 %v63, %v69
    %v75 = vsub.s32 %v63, %v73
    %v76 = vsub.s32 %v64, %v69
    %v77 = vsub.s32 %v64, %v73
    %v78 = vsub.s32 %v65, %v69
    %v79 = vsub.s32 %v65, %v73
    %vm80 = vcmp.eq.s32.totalorder %v74, 0
    %vm81 = vcmp.eq.s32.totalorder %v75, 0
    %vm82 = vcmp.eq.s32.totalorder %v76, 0
    %vm83 = vcmp.eq.s32.totalorder %v77, 0
    %vm84 = vcmp.eq.s32.totalorder %v78, 0
    %vm85 = vcmp.eq.s32.totalorder %v79, 0
    %v86 = vsel %vm80, 1, 0
    %v87 = vsel %vm81, 1, 0
    %v88 = vsel %vm82, 1, 0
    %v89 = vsel %vm83, 1, 0
    %v90 = vsel %vm84, 1, 0
    %v91 = vsel %vm85, 1, 0
    %v92 = vcvt.s32.f32 %v86
    %v93 = vcvt.s32.f32 %v87
    %v94 = vcvt.s32.f32 %v88
    %v95 = vcvt.s32.f32 %v89
    %v96 = vcvt.s32.f32 %v90
    %v97 = vcvt.s32.f32 %v91
    %v99 = vlaneseq
    %v100 = vshrl.u32 %v99, 7
    %v101 = vsub.s32 0, %v100
    %v102 = vrot.slane %v50, %v101
    %v103 = vlaneseq
    %v104 = vshrl.u32 %v103, 7
    %v105 = vsub.s32 1, %v104
    %v106 = vrot.slane %v50, %v105
    %v109 = vmul.f32 %v92, %v102
    %v110 = vmul.f32 %v93, %v106
    %v111 = vmul.f32 %v94, %v102
    %v112 = vmul.f32 %v95, %v106
    %v113 = vmul.f32 %v96, %v102
    %v114 = vmul.f32 %v97, %v106
    %vm115 = vcmp.eq.s32.totalorder %v74, 1
    %vm116 = vcmp.eq.s32.totalorder %v75, 1
    %vm117 = vcmp.eq.s32.totalorder %v76, 1
    %vm118 = vcmp.eq.s32.totalorder %v77, 1
    %vm119 = vcmp.eq.s32.totalorder %v78, 1
    %vm120 = vcmp.eq.s32.totalorder %v79, 1
    %v121 = vsel %vm115, 1, 0
    %v122 = vsel %vm116, 1, 0
    %v123 = vsel %vm117, 1, 0
    %v124 = vsel %vm118, 1, 0
    %v125 = vsel %vm119, 1, 0
    %v126 = vsel %vm120, 1, 0
    %v127 = vcvt.s32.f32 %v121
    %v128 = vcvt.s32.f32 %v122
    %v129 = vcvt.s32.f32 %v123
    %v130 = vcvt.s32.f32 %v124
    %v131 = vcvt.s32.f32 %v125
    %v132 = vcvt.s32.f32 %v126
    %v134 = vlaneseq
    %v135 = vshrl.u32 %v134, 7
    %v136 = vsub.s32 0, %v135
    %v137 = vrot.slane %v55, %v136
    %v138 = vlaneseq
    %v139 = vshrl.u32 %v138, 7
    %v140 = vsub.s32 1, %v139
    %v141 = vrot.slane %v55, %v140
    %v144 = vmul.f32 %v127, %v137
    %v145 = vmul.f32 %v128, %v141
    %v146 = vmul.f32 %v129, %v137
    %v147 = vmul.f32 %v130, %v141
    %v148 = vmul.f32 %v131, %v137
    %v149 = vmul.f32 %v132, %v141
    %v150 = vadd.f32 %v109, %v144
    %v151 = vadd.f32 %v110, %v145
    %v152 = vadd.f32 %v111, %v146
    %v153 = vadd.f32 %v112, %v147
    %v154 = vadd.f32 %v113, %v148
    %v155 = vadd.f32 %v114, %v149
    %vm156 = vcmp.eq.s32.totalorder %v74, 2
    %vm157 = vcmp.eq.s32.totalorder %v75, 2
    %vm158 = vcmp.eq.s32.totalorder %v76, 2
    %vm159 = vcmp.eq.s32.totalorder %v77, 2
    %vm160 = vcmp.eq.s32.totalorder %v78, 2
    %vm161 = vcmp.eq.s32.totalorder %v79, 2
    %v162 = vsel %vm156, 1, 0
    %v163 = vsel %vm157, 1, 0
    %v164 = vsel %vm158, 1, 0
    %v165 = vsel %vm159, 1, 0
    %v166 = vsel %vm160, 1, 0
    %v167 = vsel %vm161, 1, 0
    %v168 = vcvt.s32.f32 %v162
    %v169 = vcvt.s32.f32 %v163
    %v170 = vcvt.s32.f32 %v164
    %v171 = vcvt.s32.f32 %v165
    %v172 = vcvt.s32.f32 %v166
    %v173 = vcvt.s32.f32 %v167
    %v175 = vlaneseq
    %v176 = vshrl.u32 %v175, 7
    %v177 = vsub.s32 0, %v176
    %v178 = vrot.slane %v59, %v177
    %v179 = vlaneseq
    %v180 = vshrl.u32 %v179, 7
    %v181 = vsub.s32 1, %v180
    %v182 = vrot.slane %v59, %v181
    %v185 = vmul.f32 %v168, %v178
    %v186 = vmul.f32 %v169, %v182
    %v187 = vmul.f32 %v170, %v178
    %v188 = vmul.f32 %v171, %v182
    %v189 = vmul.f32 %v172, %v178
    %v190 = vmul.f32 %v173, %v182
    %v191 = vadd.f32 %v150, %v185
    %v192 = vadd.f32 %v151, %v186
    %v193 = vadd.f32 %v152, %v187
    %v194 = vadd.f32 %v153, %v188
    %v195 = vadd.f32 %v154, %v189
    %v196 = vadd.f32 %v155, %v190
    %vm197 = vcmp.eq.s32.totalorder %v74, 3
    %vm198 = vcmp.eq.s32.totalorder %v75, 3
    %vm199 = vcmp.eq.s32.totalorder %v76, 3
    %vm200 = vcmp.eq.s32.totalorder %v77, 3
    %vm201 = vcmp.eq.s32.totalorder %v78, 3
    %vm202 = vcmp.eq.s32.totalorder %v79, 3
    %v203 = vsel %vm197, 1, 0
    %v204 = vsel %vm198, 1, 0
    %v205 = vsel %vm199, 1, 0
    %v206 = vsel %vm200, 1, 0
    %v207 = vsel %vm201, 1, 0
    %v208 = vsel %vm202, 1, 0
    %v209 = vcvt.s32.f32 %v203
    %v210 = vcvt.s32.f32 %v204
    %v211 = vcvt.s32.f32 %v205
    %v212 = vcvt.s32.f32 %v206
    %v213 = vcvt.s32.f32 %v207
    %v214 = vcvt.s32.f32 %v208
    %v216 = vlaneseq
    %v217 = vshrl.u32 %v216, 7
    %v218 = vsub.s32 0, %v217
    %v219 = vrot.slane %v60, %v218
    %v220 = vlaneseq
    %v221 = vshrl.u32 %v220, 7
    %v222 = vsub.s32 1, %v221
    %v223 = vrot.slane %v60, %v222
    %v226 = vmul.f32 %v209, %v219
    %v227 = vmul.f32 %v210, %v223
    %v228 = vmul.f32 %v211, %v219
    %v229 = vmul.f32 %v212, %v223
    %v230 = vmul.f32 %v213, %v219
    %v231 = vmul.f32 %v214, %v223
    %v232 = vadd.f32 %v191, %v226
    %v233 = vadd.f32 %v192, %v227
    %v234 = vadd.f32 %v193, %v228
    %v235 = vadd.f32 %v194, %v229
    %v236 = vadd.f32 %v195, %v230
    %v237 = vadd.f32 %v196, %v231
    %vm238 = vcmask 146432
    %v240 = vsel %vm238, %v37, 0
    %vm242 = vcmask 1041408
    %v244 = vsel %vm242, %v236, 0
    %v247 = vsel %vm242, %v237, 0
    %249 = vmatprep.subr.mxu0 %v233
    %250 = vmatpush1.msra.mxu0 %v232
    %251 = vmatprep.subr.mxu0 %v235
    %252 = vmatpush1.msra.mxu0 %v234
    %253 = vmatprep.subr.mxu0 %v247
    %254 = vmatpush1.msra.mxu0 %v244
    %255 = vmatprep.subr.mxu0 0.0
    %256 = vmatpush1.msra.mxu0 0.0
    %257 = vmatprep.subr.mxu0 0.0
    %258 = vmatpush1.msra.mxu0 0.0
    %259 = vmatprep.subr.mxu0 0.0
    %260 = vmatpush1.msra.mxu0 0.0
    %261 = vmatprep.subr.mxu0 0.0
    %262 = vmatpush1.msra.mxu0 0.0
    %263 = vmatprep.subr.mxu0 0.0
    %264 = vmatpush1.msra.mxu0 0.0
    %265 = vmatprep.subr.mxu0 0.0
    %266 = vmatpush1.msra.mxu0 0.0
    %267 = vmatprep.subr.mxu0 0.0
    %268 = vmatpush1.msra.mxu0 0.0
    %269 = vmatprep.subr.mxu0 0.0
    %270 = vmatpush1.msra.mxu0 0.0
    %271 = vmatprep.subr.mxu0 0.0
    %272 = vmatpush1.msra.mxu0 0.0
    %273 = vmatprep.subr.mxu0 0.0
    %274 = vmatpush1.msra.mxu0 0.0
    %275 = vmatprep.subr.mxu0 0.0
    %276 = vmatpush1.msra.mxu0 0.0
    %277 = vmatprep.subr.mxu0 0.0
    %278 = vmatpush1.msra.mxu0 0.0
    %279 = vmatprep.subr.mxu0 0.0
    %280 = vmatpush1.msra.mxu0 0.0
    %281 = vmatprep.subr.mxu0 0.0
    %282 = vmatpush1.msra.mxu0 0.0
    %283 = vmatprep.subr.mxu0 0.0
    %284 = vmatpush1.msra.mxu0 0.0
    %285 = vmatprep.subr.mxu0 0.0
    %286 = vmatpush1.msra.mxu0 0.0
    %287 = vmatprep.subr.mxu0 0.0
    %288 = vmatpush1.msra.mxu0 0.0
    %289 = vmatprep.subr.mxu0 0.0
    %290 = vmatpush1.msra.mxu0 0.0
    %291 = vmatprep.subr.mxu0 0.0
    %292 = vmatpush1.msra.mxu0 0.0
    %293 = vmatprep.subr.mxu0 0.0
    %294 = vmatpush1.msra.mxu0 0.0
    %295 = vmatprep.subr.mxu0 0.0
    %296 = vmatpush1.msra.mxu0 0.0
    %297 = vmatprep.subr.mxu0 0.0
    %298 = vmatpush1.msra.mxu0 0.0
    %299 = vmatprep.subr.mxu0 0.0
    %300 = vmatpush1.msra.mxu0 0.0
    %301 = vmatprep.subr.mxu0 0.0
    %302 = vmatpush1.msra.mxu0 0.0
    %303 = vmatprep.subr.mxu0 0.0
    %304 = vmatpush1.msra.mxu0 0.0
    %305 = vmatprep.subr.mxu0 0.0
    %306 = vmatpush1.msra.mxu0 0.0
    %307 = vmatprep.subr.mxu0 0.0
    %308 = vmatpush1.msra.mxu0 0.0
    %309 = vmatprep.subr.mxu0 0.0
    %310 = vmatpush1.msra.mxu0 0.0
    %311 = vmatprep.subr.mxu0 0.0
    %312 = vmatpush1.msra.mxu0 0.0
    %313 = vmatprep.mubr.f32.mxu0 0.0
    %314 = vmatmul.mubr.f32.gmra.mrb[0].mxu0 %v240
    %v315 = vpop.f32.mrb[0].mxu0
    %v316 = vadd.f32 0.0, %v315
    %v317 = vpop.f32.mrb[0].mxu0
    %v318 = vadd.f32 0.0, %v317
    %319 = vdwg.mxu0
    %v322 = vcombine.low %v316, %v318
    %324 = vst [vmem:[#allocation7] sm:$0xff] %v322
    // Predicated region
    $region18: #{tpu_custom_call.1} parent=1 // pred_check
      _
    $region19: #{tpu_custom_call.1} parent=1 // pred_check_branch
      %326 = sbr.rel (0) target = $region21
    $region20: #{tpu_custom_call.1} parent=1 // pred_region
      %s328 = ssub.s32 128, 64
      %329 = vsyncadd [#allocation4], %s328
      %s331 = sshll.u32 [#allocation7], 4
      %s332 = int_to_ptr.vmem [resolvable:$true] %s331
      %334 = dma.vmem_to_hbm [thread:$0]  %s332, 64, %s2, [#allocation4]
    $region21: #{tpu_custom_call.1} parent=1 // pred_fallthru
      _
    // Predicated region
    $region22: #{tpu_custom_call.1} parent=1 // pred_check
      _
    $region23: #{tpu_custom_call.1} parent=1 // pred_check_branch
      %336 = sbr.rel (0) target = $region25
    $region24: #{tpu_custom_call.1} parent=1 // pred_region
      %337 = dma.done [#allocation4], 128
    $region25: #{tpu_custom_call.1} parent=1 // pred_fallthru
      _
    %338 = vsyncpa [#allocation3], 1
    %339 = vsyncpa [#allocation6], 1
    %340 = vsyncpa [#allocation4], 1

</llo_original>
